<compile_context>
chip_gen: v5e
topology: v5e:2x2
jax: 0.10.0
libtpu: 0.0.40
codegen_flags: <defaults>
</compile_context>

<pallas_src>
import jax
import jax.numpy as jnp
from jax.experimental import pallas as pl
from jax.experimental.pallas import tpu as pltpu


def _round_up(x, m):
    return (x + m - 1) // m * m


def _postprocess_kernel(x_ref, o_ref):
    # x_ref: (1, TH*W, C)   o_ref: (1, C, TH, W)
    _, _, th, w = o_ref.shape
    # Minor-dim swap (XLU): (1, TH*W, C) -> (1, C, TH*W).  The result is
    # lane-dense; everything after this touches only ~ceil(C/8)*ceil(TH*W/128)
    # vregs instead of the 4/128-utilized input tile.
    xt = jnp.transpose(x_ref[...], (0, 2, 1))
    y = jax.nn.sigmoid(xt.astype(jnp.float32)).astype(o_ref.dtype)
    # VMEM-local split of the flattened pixel axis into (H-rows, W): one
    # statically-unrolled lane-slice store per image row.  This keeps the
    # [B,C,N] -> [B,C,H,W] "view" inside the kernel instead of leaving an
    # XLA relayout (full HBM read+write) in the wrapper.
    for r in range(th):
        o_ref[:, :, r, :] = y[:, :, r * w:(r + 1) * w]


def _choose_row_tile(height, width, channels, itemsize, *, max_rows=64):
    """Image rows per grid step.

    Largest row count that (a) divides H, (b) is a multiple of 8 (or H itself)
    so the (8,128) block rule holds, (c) keeps the double-buffered, lane-padded
    VMEM footprint under a conservative budget (v7x-safe), and (d) bounds the
    per-row store unroll.
    """
    budget = 8 * 1024 * 1024  # bytes; well under v7x's 32 MiB scoped default

    def fits(th):
        in_bytes = th * width * 128 * itemsize  # C (<128) pads to 128 lanes
        out_bytes = channels * _round_up(th, 8) * _round_up(width, 128) * itemsize
        return 2 * (in_bytes + out_bytes) <= budget  # x2: double-buffered

    if height <= max_rows and fits(height):
        return height
    best = None
    for th in range(8, min(height, max_rows) + 1, 8):
        if height % th == 0 and fits(th):
            best = th
    return best if best is not None else height


def post_processor(x, image_channels, image_height, image_width,
                   *, out_dtype=None, row_tile=None):
    """x: [B, H*W, C] -> sigmoid(permute(0,2,1).view(B,C,H,W)) : [B, C, H, W]."""
    B, N, C = x.shape
    H, W = image_height, image_width
    assert C == image_channels
    assert N == H * W
    out_dtype = x.dtype if out_dtype is None else out_dtype

    th = row_tile if row_tile is not None else _choose_row_tile(
        H, W, C, jnp.dtype(x.dtype).itemsize)
    assert H % th == 0, (H, th)
    tn = th * W  # flattened pixels per grid step

    return pl.pallas_call(
        _postprocess_kernel,
        out_shape=jax.ShapeDtypeStruct((B, C, H, W), out_dtype),
        grid_spec=pltpu.PrefetchScalarGridSpec(
            num_scalar_prefetch=0,
            grid=(B, H // th),
            in_specs=[pl.BlockSpec((1, tn, C), lambda b, h: (b, h, 0))],
            out_specs=pl.BlockSpec((1, C, th, W), lambda b, h: (b, 0, h, 0)),
        ),
        compiler_params=pltpu.CompilerParams(
            dimension_semantics=("parallel", "parallel"),
        ),
    )(x)


if __name__ == "__main__":
    # Small shapes consistent with the module: B=2, C=4, H=W=16  =>  N=256
    B, C, H, W = 2, 4, 16, 16
    N = H * W

    key = jax.random.PRNGKey(0)
    x = jax.random.normal(key, (B, N, C), dtype=jnp.float32)

    out = jax.block_until_ready(
        post_processor(x, image_channels=C, image_height=H, image_width=W))

    # Reference in plain JAX (mirrors the PyTorch forward exactly).
    ref = jax.nn.sigmoid(jnp.transpose(x, (0, 2, 1)).reshape(B, C, H, W))
    assert out.shape == (B, C, H, W)
    assert out.dtype == x.dtype
    assert jnp.allclose(out, ref, atol=1e-6, rtol=1e-6)

    print("KERNEL_OK")
</pallas_src>

<mosaic_0001>
module attributes {stable_mosaic.version = 11 : i64} {
  func.func @_postprocess_kernel(%arg0: i32, %arg1: i32, %arg2: memref<1x256x4xf32, #tpu.memory_space<vmem>>, %arg3: memref<1x4x16x16xf32, #tpu.memory_space<vmem>>) attributes {dimension_semantics = [#tpu.dimension_semantics<parallel>, #tpu.dimension_semantics<parallel>], iteration_bounds = array<i64: 2, 1>, scalar_prefetch = 0 : i64, scratch_operands = 0 : i64, tpu.core_type = #tpu.core_type<tc>, window_params = [{transform_indices = @transform_0, window_bounds = array<i64: 1, 256, 4>}, {transform_indices = @transform_1, window_bounds = array<i64: 1, 4, 16, 16>}]} {
    %c0 = arith.constant 0 : index
    %c0_0 = arith.constant 0 : index
    %c0_1 = arith.constant 0 : index
    %0 = vector.load %arg2[%c0, %c0_0, %c0_1] : memref<1x256x4xf32, #tpu.memory_space<vmem>>, vector<1x256x4xf32>
    %1 = tpu.transpose %0, [0, 2, 1] : vector<1x256x4xf32> -> vector<1x4x256xf32>
    %2 = arith.negf %1 : vector<1x4x256xf32>
    %3 = math.exp %2 : vector<1x4x256xf32>
    %cst = arith.constant 1.000000e+00 : f32
    %4 = vector.broadcast %cst : f32 to vector<1x4x256xf32>
    %5 = arith.addf %4, %3 : vector<1x4x256xf32>
    %6 = arith.divf %4, %5 : vector<1x4x256xf32>
    %7 = vector.extract_strided_slice %6 {offsets = [0, 0, 0], sizes = [1, 4, 16], strides = [1, 1, 1]} : vector<1x4x256xf32> to vector<1x4x16xf32>
    %c0_2 = arith.constant 0 : index
    %c0_3 = arith.constant 0 : index
    %c0_4 = arith.constant 0 : index
    %c0_5 = arith.constant 0 : index
    %8 = vector.load %arg3[%c0_2, %c0_3, %c0_4, %c0_5] : memref<1x4x16x16xf32, #tpu.memory_space<vmem>>, vector<1x4x1x16xf32>
    %9 = vector.shape_cast %8 : vector<1x4x1x16xf32> to vector<1x4x16xf32>
    %10 = vector.shape_cast %7 : vector<1x4x16xf32> to vector<1x4x1x16xf32>
    tpu.vector_store %arg3[%c0_2, %c0_3, %c0_4, %c0_5], %10 {strides = array<i32>} : memref<1x4x16x16xf32, #tpu.memory_space<vmem>>, vector<1x4x1x16xf32>,
    %11 = vector.extract_strided_slice %6 {offsets = [0, 0, 16], sizes = [1, 4, 16], strides = [1, 1, 1]} : vector<1x4x256xf32> to vector<1x4x16xf32>
    %c0_6 = arith.constant 0 : index
    %c0_7 = arith.constant 0 : index
    %c1 = arith.constant 1 : index
    %c0_8 = arith.constant 0 : index
    %12 = vector.load %arg3[%c0_6, %c0_7, %c1, %c0_8] : memref<1x4x16x16xf32, #tpu.memory_space<vmem>>, vector<1x4x1x16xf32>
    %13 = vector.shape_cast %12 : vector<1x4x1x16xf32> to vector<1x4x16xf32>
    %14 = vector.shape_cast %11 : vector<1x4x16xf32> to vector<1x4x1x16xf32>
    tpu.vector_store %arg3[%c0_6, %c0_7, %c1, %c0_8], %14 {strides = array<i32>} : memref<1x4x16x16xf32, #tpu.memory_space<vmem>>, vector<1x4x1x16xf32>,
    %15 = vector.extract_strided_slice %6 {offsets = [0, 0, 32], sizes = [1, 4, 16], strides = [1, 1, 1]} : vector<1x4x256xf32> to vector<1x4x16xf32>
    %c0_9 = arith.constant 0 : index
    %c0_10 = arith.constant 0 : index
    %c2 = arith.constant 2 : index
    %c0_11 = arith.constant 0 : index
    %16 = vector.load %arg3[%c0_9, %c0_10, %c2, %c0_11] : memref<1x4x16x16xf32, #tpu.memory_space<vmem>>, vector<1x4x1x16xf32>
    %17 = vector.shape_cast %16 : vector<1x4x1x16xf32> to vector<1x4x16xf32>
    %18 = vector.shape_cast %15 : vector<1x4x16xf32> to vector<1x4x1x16xf32>
    tpu.vector_store %arg3[%c0_9, %c0_10, %c2, %c0_11], %18 {strides = array<i32>} : memref<1x4x16x16xf32, #tpu.memory_space<vmem>>, vector<1x4x1x16xf32>,
    %19 = vector.extract_strided_slice %6 {offsets = [0, 0, 48], sizes = [1, 4, 16], strides = [1, 1, 1]} : vector<1x4x256xf32> to vector<1x4x16xf32>
    %c0_12 = arith.constant 0 : index
    %c0_13 = arith.constant 0 : index
    %c3 = arith.constant 3 : index
    %c0_14 = arith.constant 0 : index
    %20 = vector.load %arg3[%c0_12, %c0_13, %c3, %c0_14] : memref<1x4x16x16xf32, #tpu.memory_space<vmem>>, vector<1x4x1x16xf32>
    %21 = vector.shape_cast %20 : vector<1x4x1x16xf32> to vector<1x4x16xf32>
    %22 = vector.shape_cast %19 : vector<1x4x16xf32> to vector<1x4x1x16xf32>
    tpu.vector_store %arg3[%c0_12, %c0_13, %c3, %c0_14], %22 {strides = array<i32>} : memref<1x4x16x16xf32, #tpu.memory_space<vmem>>, vector<1x4x1x16xf32>,
    %23 = vector.extract_strided_slice %6 {offsets = [0, 0, 64], sizes = [1, 4, 16], strides = [1, 1, 1]} : vector<1x4x256xf32> to vector<1x4x16xf32>
    %c0_15 = arith.constant 0 : index
    %c0_16 = arith.constant 0 : index
    %c4 = arith.constant 4 : index
    %c0_17 = arith.constant 0 : index
    %24 = vector.load %arg3[%c0_15, %c0_16, %c4, %c0_17] : memref<1x4x16x16xf32, #tpu.memory_space<vmem>>, vector<1x4x1x16xf32>
    %25 = vector.shape_cast %24 : vector<1x4x1x16xf32> to vector<1x4x16xf32>
    %26 = vector.shape_cast %23 : vector<1x4x16xf32> to vector<1x4x1x16xf32>
    tpu.vector_store %arg3[%c0_15, %c0_16, %c4, %c0_17], %26 {strides = array<i32>} : memref<1x4x16x16xf32, #tpu.memory_space<vmem>>, vector<1x4x1x16xf32>,
    %27 = vector.extract_strided_slice %6 {offsets = [0, 0, 80], sizes = [1, 4, 16], strides = [1, 1, 1]} : vector<1x4x256xf32> to vector<1x4x16xf32>
    %c0_18 = arith.constant 0 : index
    %c0_19 = arith.constant 0 : index
    %c5 = arith.constant 5 : index
    %c0_20 = arith.constant 0 : index
    %28 = vector.load %arg3[%c0_18, %c0_19, %c5, %c0_20] : memref<1x4x16x16xf32, #tpu.memory_space<vmem>>, vector<1x4x1x16xf32>
    %29 = vector.shape_cast %28 : vector<1x4x1x16xf32> to vector<1x4x16xf32>
    %30 = vector.shape_cast %27 : vector<1x4x16xf32> to vector<1x4x1x16xf32>
    tpu.vector_store %arg3[%c0_18, %c0_19, %c5, %c0_20], %30 {strides = array<i32>} : memref<1x4x16x16xf32, #tpu.memory_space<vmem>>, vector<1x4x1x16xf32>,
    %31 = vector.extract_strided_slice %6 {offsets = [0, 0, 96], sizes = [1, 4, 16], strides = [1, 1, 1]} : vector<1x4x256xf32> to vector<1x4x16xf32>
    %c0_21 = arith.constant 0 : index
    %c0_22 = arith.constant 0 : index
    %c6 = arith.constant 6 : index
    %c0_23 = arith.constant 0 : index
    %32 = vector.load %arg3[%c0_21, %c0_22, %c6, %c0_23] : memref<1x4x16x16xf32, #tpu.memory_space<vmem>>, vector<1x4x1x16xf32>
    %33 = vector.shape_cast %32 : vector<1x4x1x16xf32> to vector<1x4x16xf32>
    %34 = vector.shape_cast %31 : vector<1x4x16xf32> to vector<1x4x1x16xf32>
    tpu.vector_store %arg3[%c0_21, %c0_22, %c6, %c0_23], %34 {strides = array<i32>} : memref<1x4x16x16xf32, #tpu.memory_space<vmem>>, vector<1x4x1x16xf32>,
    %35 = vector.extract_strided_slice %6 {offsets = [0, 0, 112], sizes = [1, 4, 16], strides = [1, 1, 1]} : vector<1x4x256xf32> to vector<1x4x16xf32>
    %c0_24 = arith.constant 0 : index
    %c0_25 = arith.constant 0 : index
    %c7 = arith.constant 7 : index
    %c0_26 = arith.constant 0 : index
    %36 = vector.load %arg3[%c0_24, %c0_25, %c7, %c0_26] : memref<1x4x16x16xf32, #tpu.memory_space<vmem>>, vector<1x4x1x16xf32>
    %37 = vector.shape_cast %36 : vector<1x4x1x16xf32> to vector<1x4x16xf32>
    %38 = vector.shape_cast %35 : vector<1x4x16xf32> to vector<1x4x1x16xf32>
    tpu.vector_store %arg3[%c0_24, %c0_25, %c7, %c0_26], %38 {strides = array<i32>} : memref<1x4x16x16xf32, #tpu.memory_space<vmem>>, vector<1x4x1x16xf32>,
    %39 = vector.extract_strided_slice %6 {offsets = [0, 0, 128], sizes = [1, 4, 16], strides = [1, 1, 1]} : vector<1x4x256xf32> to vector<1x4x16xf32>
    %c0_27 = arith.constant 0 : index
    %c0_28 = arith.constant 0 : index
    %c8 = arith.constant 8 : index
    %c0_29 = arith.constant 0 : index
    %40 = vector.load %arg3[%c0_27, %c0_28, %c8, %c0_29] : memref<1x4x16x16xf32, #tpu.memory_space<vmem>>, vector<1x4x1x16xf32>
    %41 = vector.shape_cast %40 : vector<1x4x1x16xf32> to vector<1x4x16xf32>
    %42 = vector.shape_cast %39 : vector<1x4x16xf32> to vector<1x4x1x16xf32>
    tpu.vector_store %arg3[%c0_27, %c0_28, %c8, %c0_29], %42 {strides = array<i32>} : memref<1x4x16x16xf32, #tpu.memory_space<vmem>>, vector<1x4x1x16xf32>,
    %43 = vector.extract_strided_slice %6 {offsets = [0, 0, 144], sizes = [1, 4, 16], strides = [1, 1, 1]} : vector<1x4x256xf32> to vector<1x4x16xf32>
    %c0_30 = arith.constant 0 : index
    %c0_31 = arith.constant 0 : index
    %c9 = arith.constant 9 : index
    %c0_32 = arith.constant 0 : index
    %44 = vector.load %arg3[%c0_30, %c0_31, %c9, %c0_32] : memref<1x4x16x16xf32, #tpu.memory_space<vmem>>, vector<1x4x1x16xf32>
    %45 = vector.shape_cast %44 : vector<1x4x1x16xf32> to vector<1x4x16xf32>
    %46 = vector.shape_cast %43 : vector<1x4x16xf32> to vector<1x4x1x16xf32>
    tpu.vector_store %arg3[%c0_30, %c0_31, %c9, %c0_32], %46 {strides = array<i32>} : memref<1x4x16x16xf32, #tpu.memory_space<vmem>>, vector<1x4x1x16xf32>,
    %47 = vector.extract_strided_slice %6 {offsets = [0, 0, 160], sizes = [1, 4, 16], strides = [1, 1, 1]} : vector<1x4x256xf32> to vector<1x4x16xf32>
    %c0_33 = arith.constant 0 : index
    %c0_34 = arith.constant 0 : index
    %c10 = arith.constant 10 : index
    %c0_35 = arith.constant 0 : index
    %48 = vector.load %arg3[%c0_33, %c0_34, %c10, %c0_35] : memref<1x4x16x16xf32, #tpu.memory_space<vmem>>, vector<1x4x1x16xf32>
    %49 = vector.shape_cast %48 : vector<1x4x1x16xf32> to vector<1x4x16xf32>
    %50 = vector.shape_cast %47 : vector<1x4x16xf32> to vector<1x4x1x16xf32>
    tpu.vector_store %arg3[%c0_33, %c0_34, %c10, %c0_35], %50 {strides = array<i32>} : memref<1x4x16x16xf32, #tpu.memory_space<vmem>>, vector<1x4x1x16xf32>,
    %51 = vector.extract_strided_slice %6 {offsets = [0, 0, 176], sizes = [1, 4, 16], strides = [1, 1, 1]} : vector<1x4x256xf32> to vector<1x4x16xf32>
    %c0_36 = arith.constant 0 : index
    %c0_37 = arith.constant 0 : index
    %c11 = arith.constant 11 : index
    %c0_38 = arith.constant 0 : index
    %52 = vector.load %arg3[%c0_36, %c0_37, %c11, %c0_38] : memref<1x4x16x16xf32, #tpu.memory_space<vmem>>, vector<1x4x1x16xf32>
    %53 = vector.shape_cast %52 : vector<1x4x1x16xf32> to vector<1x4x16xf32>
    %54 = vector.shape_cast %51 : vector<1x4x16xf32> to vector<1x4x1x16xf32>
    tpu.vector_store %arg3[%c0_36, %c0_37, %c11, %c0_38], %54 {strides = array<i32>} : memref<1x4x16x16xf32, #tpu.memory_space<vmem>>, vector<1x4x1x16xf32>,
    %55 = vector.extract_strided_slice %6 {offsets = [0, 0, 192], sizes = [1, 4, 16], strides = [1, 1, 1]} : vector<1x4x256xf32> to vector<1x4x16xf32>
    %c0_39 = arith.constant 0 : index
    %c0_40 = arith.constant 0 : index
    %c12 = arith.constant 12 : index
    %c0_41 = arith.constant 0 : index
    %56 = vector.load %arg3[%c0_39, %c0_40, %c12, %c0_41] : memref<1x4x16x16xf32, #tpu.memory_space<vmem>>, vector<1x4x1x16xf32>
    %57 = vector.shape_cast %56 : vector<1x4x1x16xf32> to vector<1x4x16xf32>
    %58 = vector.shape_cast %55 : vector<1x4x16xf32> to vector<1x4x1x16xf32>
    tpu.vector_store %arg3[%c0_39, %c0_40, %c12, %c0_41], %58 {strides = array<i32>} : memref<1x4x16x16xf32, #tpu.memory_space<vmem>>, vector<1x4x1x16xf32>,
    %59 = vector.extract_strided_slice %6 {offsets = [0, 0, 208], sizes = [1, 4, 16], strides = [1, 1, 1]} : vector<1x4x256xf32> to vector<1x4x16xf32>
    %c0_42 = arith.constant 0 : index
    %c0_43 = arith.constant 0 : index
    %c13 = arith.constant 13 : index
    %c0_44 = arith.constant 0 : index
    %60 = vector.load %arg3[%c0_42, %c0_43, %c13, %c0_44] : memref<1x4x16x16xf32, #tpu.memory_space<vmem>>, vector<1x4x1x16xf32>
    %61 = vector.shape_cast %60 : vector<1x4x1x16xf32> to vector<1x4x16xf32>
    %62 = vector.shape_cast %59 : vector<1x4x16xf32> to vector<1x4x1x16xf32>
    tpu.vector_store %arg3[%c0_42, %c0_43, %c13, %c0_44], %62 {strides = array<i32>} : memref<1x4x16x16xf32, #tpu.memory_space<vmem>>, vector<1x4x1x16xf32>,
    %63 = vector.extract_strided_slice %6 {offsets = [0, 0, 224], sizes = [1, 4, 16], strides = [1, 1, 1]} : vector<1x4x256xf32> to vector<1x4x16xf32>
    %c0_45 = arith.constant 0 : index
    %c0_46 = arith.constant 0 : index
    %c14 = arith.constant 14 : index
    %c0_47 = arith.constant 0 : index
    %64 = vector.load %arg3[%c0_45, %c0_46, %c14, %c0_47] : memref<1x4x16x16xf32, #tpu.memory_space<vmem>>, vector<1x4x1x16xf32>
    %65 = vector.shape_cast %64 : vector<1x4x1x16xf32> to vector<1x4x16xf32>
    %66 = vector.shape_cast %63 : vector<1x4x16xf32> to vector<1x4x1x16xf32>
    tpu.vector_store %arg3[%c0_45, %c0_46, %c14, %c0_47], %66 {strides = array<i32>} : memref<1x4x16x16xf32, #tpu.memory_space<vmem>>, vector<1x4x1x16xf32>,
    %67 = vector.extract_strided_slice %6 {offsets = [0, 0, 240], sizes = [1, 4, 16], strides = [1, 1, 1]} : vector<1x4x256xf32> to vector<1x4x16xf32>
    %c0_48 = arith.constant 0 : index
    %c0_49 = arith.constant 0 : index
    %c15 = arith.constant 15 : index
    %c0_50 = arith.constant 0 : index
    %68 = vector.load %arg3[%c0_48, %c0_49, %c15, %c0_50] : memref<1x4x16x16xf32, #tpu.memory_space<vmem>>, vector<1x4x1x16xf32>
    %69 = vector.shape_cast %68 : vector<1x4x1x16xf32> to vector<1x4x16xf32>
    %70 = vector.shape_cast %67 : vector<1x4x16xf32> to vector<1x4x1x16xf32>
    tpu.vector_store %arg3[%c0_48, %c0_49, %c15, %c0_50], %70 {strides = array<i32>} : memref<1x4x16x16xf32, #tpu.memory_space<vmem>>, vector<1x4x1x16xf32>,
    return
  }
  func.func @transform_0(%arg0: i32, %arg1: i32) -> (i32, i32, i32) {
    %c0_i32 = arith.constant 0 : i32
    %c0_i32_0 = arith.constant 0 : i32
    return %arg0, %arg1, %c0_i32 : i32, i32, i32
  }
  func.func @transform_1(%arg0: i32, %arg1: i32) -> (i32, i32, i32, i32) {
    %c0_i32 = arith.constant 0 : i32
    %c0_i32_0 = arith.constant 0 : i32
    %c0_i32_1 = arith.constant 0 : i32
    return %arg0, %c0_i32, %arg1, %c0_i32_0 : i32, i32, i32, i32
  }
}

</mosaic_0001>

<llo_original>
// kernel: tpu_custom_call.1
$region0: #{tpu_custom_call.1}
  #allocation0 [shape = 'u32[]', space=smem, size = 0x4, offset = 0x4, fixed_abs, tag = 'smem constant byte address 0x4 - core index']
  #allocation1 [shape = 'u32[72,128]{1,0:T(1,128)}', space=vmem, size = 0x9000, scoped, tag = 'internal scratch']
  %s0 = inlined_call_operand.vmem [shape: f32[2,256,4], index: 0, kind: input, shape index: {}]
  %s1 = inlined_call_operand.hbm [shape: f32[2,4,16,16], index: 1, kind: output, shape index: {}]
  %s2 = sld [smem:[#allocation0]]
  $region37: #{tpu_custom_call.1} parent=0
    _
  %s4 = ssub.s32 1, %s2
  %s5 = scalar_select 0, %s4, %s2
  $region1: #{tpu_custom_call.1} parent=0
    #allocation2 [shape = 'u8[65536]{0}', space=vmem, size = 0x10000, scoped, tag = 'output window, operand 0']
    #allocation3 [shape = 's32[2]{0}', space=sflag, size = 0x8, scoped, tag = 'scoped memory for tpu_custom_call.1']
    %6 = vsyncpa [#allocation3], 0
    %s7 = scalar_lea.sflag [#allocation3], 1
    %8 = vsyncpa %s7, 0
    loop: start=0, step=1, limit=4
    $region2: #{tpu_custom_call.1} parent=1 // loop_pre_header
      _
    $region3: #{tpu_custom_call.1} parent=1 // loop_header
      %s10 = sphi 0, %s14
      %p11 = scmp.ge.s32.totalorder %s10, 4
      %s17 = sphi 0, %s29
      %s18 = sphi 0, %s25
      %s19 = sphi 0, %s17
      %s20 = sphi 0, %s18
      %s21 = sphi 0, %s19
      %s22 = sphi 0, %s20
      %s34 = sphi 0, %s36
      %s37 = sphi 0, %s34
      %s38 = sphi 0, %s37
      %s54 = sphi 0, %s38
      %s62 = sphi 0, %s64
      %s65 = sphi 0, %s62
      %s66 = sphi 0, %s65
      %s82 = sphi 0, %s66
    $region4: #{tpu_custom_call.1} parent=1 // loop_header_branch
      %13 = sbr.rel (%p11) target = $region8
    $region5: #{tpu_custom_call.1} parent=1 // loop_body
      %s15 = ssub.s32 %s10, 1
      %s16 = ssub.s32 %s10, 2
      %s23 = sadd.s32 1, %s18
      %p24 = scmp.ge.s32.totalorder %s23, 1
      %s25 = scalar_select %p24, 0, %s23
      %s26 = sadd.s32 1, %s17
      %s27 = scalar_select %p24, %s26, %s17
      %p28 = scmp.ge.s32.totalorder %s27, 2
      %s29 = scalar_select %p28, 0, %s27
      %s30 = ssub.s32 %s17, %s29
      %s31 = ssub.s32 %s18, %s25
      %s32 = sor.u32 %s30, %s31
      %p33 = scmp.eq.s32.totalorder %s32, 0
      %s35 = sadd.s32 %s34, 1
      %s36 = scalar_select %p33, %s34, %s35
      %p39 = pneg %p33
      %p40 = scmp.eq.s32.totalorder %s10, 1
      %p41 = por %p39, %p40
      %p42 = scmp.ne.s32.totalorder %s34, %s37
      %p43 = scmp.eq.s32.totalorder %s10, 0
      %p44 = por %p42, %p43
      %p45 = scmp.ne.s32.totalorder %s34, %s37
      %p46 = scmp.eq.s32.totalorder %s15, 1
      %p47 = por %p45, %p46
      %p48 = scmp.ne.s32.totalorder %s37, %s38
      %p49 = scmp.eq.s32.totalorder %s15, 0
      %p50 = por %p48, %p49
      %p51 = scmp.ne.s32.totalorder %s37, %s38
      %p52 = scmp.eq.s32.totalorder %s16, 1
      %p53 = por %p51, %p52
      %p55 = scmp.ne.s32.totalorder %s38, %s54
      %p56 = scmp.eq.s32.totalorder %s16, 0
      %p57 = por %p55, %p56
      %s58 = ssub.s32 %s17, %s29
      %s59 = ssub.s32 %s18, %s25
      %s60 = sor.u32 %s58, %s59
      %p61 = scmp.eq.s32.totalorder %s60, 0
      %s63 = sadd.s32 %s62, 1
      %s64 = scalar_select %p61, %s62, %s63
      %p67 = pneg %p61
      %p68 = scmp.eq.s32.totalorder %s10, 1
      %p69 = por %p67, %p68
      %p70 = scmp.ne.s32.totalorder %s62, %s65
      %p71 = scmp.eq.s32.totalorder %s10, 0
      %p72 = por %p70, %p71
      %p73 = scmp.ne.s32.totalorder %s62, %s65
      %p74 = scmp.eq.s32.totalorder %s15, 1
      %p75 = por %p73, %p74
      %p76 = scmp.ne.s32.totalorder %s65, %s66
      %p77 = scmp.eq.s32.totalorder %s15, 0
      %p78 = por %p76, %p77
      %p79 = scmp.ne.s32.totalorder %s65, %s66
      %p80 = scmp.eq.s32.totalorder %s16, 1
      %p81 = por %p79, %p80
      %p83 = scmp.ne.s32.totalorder %s66, %s82
      %p84 = scmp.eq.s32.totalorder %s16, 0
      %p85 = por %p83, %p84
      %p86 = scmp.le.s32.totalorder 1, %s10
      %p87 = scmp.lt.s32.totalorder %s10, 3
      %p88 = pnand %p86, %p87
      %p89 = pneg %p88
      // Predicated region
      $region9: #{tpu_custom_call.1} parent=5 // pred_check
        _
      $region10: #{tpu_custom_call.1} parent=5 // pred_check_branch
        %91 = sbr.rel (%p88) target = $region12
      $region11: #{tpu_custom_call.1} parent=5 // pred_region
        %s92 = ssub.s32 %s10, 1
      $region12: #{tpu_custom_call.1} parent=5 // pred_fallthru
        _
      %p93 = scmp.lt.s32.totalorder %s10, 2
      // Predicated region
      $region13: #{tpu_custom_call.1} parent=5 // pred_check
        %p94 = pneg %p93
      $region14: #{tpu_custom_call.1} parent=5 // pred_check_branch
        %96 = sbr.rel (%p94) target = $region16
      $region15: #{tpu_custom_call.1} parent=5 // pred_region
        // Predicated region
        $region17: #{tpu_custom_call.1} parent=15 // pred_check
          %p97 = pneg %p44
        $region18: #{tpu_custom_call.1} parent=15 // pred_check_branch
          %99 = sbr.rel (%p97) target = $region20
        $region19: #{tpu_custom_call.1} parent=15 // pred_region
          %s100 = smul.u32 32, %s18
          %p101 = scmp.lt.s32.totalorder %s17, 1
          %s102 = scalar_select %p101, %s17, 1
          %p103 = scmp.lt.s32.totalorder %s100, 31
          %s104 = scalar_select %p103, %s100, 31
          %s105 = smul.addr %s102, 32
          %s106 = sadd.s32 %s104, %s105
          %s107 = smul.addr %s106, 8
          %s108 = scalar_lea.vmem %s0, %s107
          %s109 = smul.u32 32, %s18
        $region20: #{tpu_custom_call.1} parent=15 // pred_fallthru
          _
      $region16: #{tpu_custom_call.1} parent=5 // pred_fallthru
        _
      %p110 = scmp.le.s32.totalorder 1, %s10
      %p111 = scmp.lt.s32.totalorder %s10, 3
      %p112 = pnand %p110, %p111
      %p113 = pneg %p112
      // Predicated region
      $region21: #{tpu_custom_call.1} parent=5 // pred_check
        _
      $region22: #{tpu_custom_call.1} parent=5 // pred_check_branch
        %115 = sbr.rel (%p112) target = $region24
      $region23: #{tpu_custom_call.1} parent=5 // pred_region
        %s116 = ssub.s32 %s10, 1
        %s117 = smul.u32 32, %s20
        %p118 = scmp.lt.s32.totalorder %s19, 1
        %s119 = scalar_select %p118, %s19, 1
        %p120 = scmp.lt.s32.totalorder %s117, 31
        %s121 = scalar_select %p120, %s117, 31
        %s122 = smul.addr %s119, 32
        %s123 = sadd.s32 %s121, %s122
        %s124 = smul.addr %s123, 8
        %s125 = scalar_lea.vmem %s0, %s124
        %p126 = pneg %p50
        %p127 = pneg %p47
        %p128 = pneg %p78
        %p129 = pneg %p75
        %s130 = sand.u32 %s65, 1
        %s131 = scalar_lea.sflag [#allocation3], %s130
        %s132 = sand.u32 %s65, 1
        %s133 = smul.addr %s132, 64
        %s134 = scalar_lea.vmem [#allocation2], %s133
        %s135 = smul.u32 32, %s20
        %p136 = scmp.lt.s32.totalorder %s19, 1
        %s137 = scalar_select %p136, %s19, 1
        %p138 = scmp.lt.s32.totalorder %s135, 31
        %s139 = scalar_select %p138, %s135, 31
        %s140 = smul.addr %s137, 32
        %s141 = sadd.s32 %s139, %s140
        %s142 = smul.addr %s141, 8
        %s143 = scalar_lea.vmem %s0, %s142
        %s144 = smul.u32 32, %s20
        %s145 = smul.u32 2, %s20
        %v146 = vld [vmem:[%s143] sm:$0xff]
        %v147 = vld [vmem:[%s143 + $0x8] sm:$0xff]
        %v148 = vld [vmem:[%s143 + $0x10] sm:$0xff]
        %v149 = vld [vmem:[%s143 + $0x18] sm:$0xff]
        %v150 = vld [vmem:[%s143 + $0x20] sm:$0xff]
        %v151 = vld [vmem:[%s143 + $0x28] sm:$0xff]
        %v152 = vld [vmem:[%s143 + $0x30] sm:$0xff]
        %v153 = vld [vmem:[%s143 + $0x38] sm:$0xff]
        %v154 = vld [vmem:[%s143 + $0x40] sm:$0xff]
        %v155 = vld [vmem:[%s143 + $0x48] sm:$0xff]
        %v156 = vld [vmem:[%s143 + $0x50] sm:$0xff]
        %v157 = vld [vmem:[%s143 + $0x58] sm:$0xff]
        %v158 = vld [vmem:[%s143 + $0x60] sm:$0xff]
        %v159 = vld [vmem:[%s143 + $0x68] sm:$0xff]
        %v160 = vld [vmem:[%s143 + $0x70] sm:$0xff]
        %v161 = vld [vmem:[%s143 + $0x78] sm:$0xff]
        %v162 = vld [vmem:[%s143 + $0x80] sm:$0xff]
        %v163 = vld [vmem:[%s143 + $0x88] sm:$0xff]
        %v164 = vld [vmem:[%s143 + $0x90] sm:$0xff]
        %v165 = vld [vmem:[%s143 + $0x98] sm:$0xff]
        %v166 = vld [vmem:[%s143 + $0xa0] sm:$0xff]
        %v167 = vld [vmem:[%s143 + $0xa8] sm:$0xff]
        %v168 = vld [vmem:[%s143 + $0xb0] sm:$0xff]
        %v169 = vld [vmem:[%s143 + $0xb8] sm:$0xff]
        %v170 = vld [vmem:[%s143 + $0xc0] sm:$0xff]
        %v171 = vld [vmem:[%s143 + $0xc8] sm:$0xff]
        %v172 = vld [vmem:[%s143 + $0xd0] sm:$0xff]
        %v173 = vld [vmem:[%s143 + $0xd8] sm:$0xff]
        %v174 = vld [vmem:[%s143 + $0xe0] sm:$0xff]
        %v175 = vld [vmem:[%s143 + $0xe8] sm:$0xff]
        %v176 = vld [vmem:[%s143 + $0xf0] sm:$0xff]
        %v177 = vld [vmem:[%s143 + $0xf8] sm:$0xff]
        %178 = vxpose.xlu0.b32.start [1/16] %v146, 128
        %179 = vxpose.xlu0.b32.cont [2/16] %v147, 128
        %180 = vxpose.xlu0.b32.cont [3/16] %v148, 128
        %181 = vxpose.xlu0.b32.cont [4/16] %v149, 128
        %182 = vxpose.xlu0.b32.cont [5/16] %v150, 128
        %183 = vxpose.xlu0.b32.cont [6/16] %v151, 128
        %184 = vxpose.xlu0.b32.cont [7/16] %v152, 128
        %185 = vxpose.xlu0.b32.cont [8/16] %v153, 128
        %186 = vxpose.xlu0.b32.cont [9/16] %v154, 128
        %187 = vxpose.xlu0.b32.cont [10/16] %v155, 128
        %188 = vxpose.xlu0.b32.cont [11/16] %v156, 128
        %189 = vxpose.xlu0.b32.cont [12/16] %v157, 128
        %190 = vxpose.xlu0.b32.cont [13/16] %v158, 128
        %191 = vxpose.xlu0.b32.cont [14/16] %v159, 128
        %192 = vxpose.xlu0.b32.cont [15/16] %v160, 128
        %193 = vxpose.xlu0.b32.end [16/16] %v161, 128
        %v194 = vpop.trf.xlu0
        %v195 = vpop.trf.xlu0
        %v196 = vpop.trf.xlu0
        %v197 = vpop.trf.xlu0
        %v198 = vpop.trf.xlu0
        %v199 = vpop.trf.xlu0
        %v200 = vpop.trf.xlu0
        %v201 = vpop.trf.xlu0
        %v202 = vpop.trf.xlu0
        %v203 = vpop.trf.xlu0
        %v204 = vpop.trf.xlu0
        %v205 = vpop.trf.xlu0
        %v206 = vpop.trf.xlu0
        %v207 = vpop.trf.xlu0
        %v208 = vpop.trf.xlu0
        %v209 = vpop.trf.xlu0
        %210 = vxpose.xlu0.b32.start [1/16] %v162, 128
        %211 = vxpose.xlu0.b32.cont [2/16] %v163, 128
        %212 = vxpose.xlu0.b32.cont [3/16] %v164, 128
        %213 = vxpose.xlu0.b32.cont [4/16] %v165, 128
        %214 = vxpose.xlu0.b32.cont [5/16] %v166, 128
        %215 = vxpose.xlu0.b32.cont [6/16] %v167, 128
        %216 = vxpose.xlu0.b32.cont [7/16] %v168, 128
        %217 = vxpose.xlu0.b32.cont [8/16] %v169, 128
        %218 = vxpose.xlu0.b32.cont [9/16] %v170, 128
        %219 = vxpose.xlu0.b32.cont [10/16] %v171, 128
        %220 = vxpose.xlu0.b32.cont [11/16] %v172, 128
        %221 = vxpose.xlu0.b32.cont [12/16] %v173, 128
        %222 = vxpose.xlu0.b32.cont [13/16] %v174, 128
        %223 = vxpose.xlu0.b32.cont [14/16] %v175, 128
        %224 = vxpose.xlu0.b32.cont [15/16] %v176, 128
        %225 = vxpose.xlu0.b32.end [16/16] %v177, 128
        %v226 = vpop.trf.xlu0
        %v227 = vpop.trf.xlu0
        %v228 = vpop.trf.xlu0
        %v229 = vpop.trf.xlu0
        %v230 = vpop.trf.xlu0
        %v231 = vpop.trf.xlu0
        %v232 = vpop.trf.xlu0
        %v233 = vpop.trf.xlu0
        %v234 = vpop.trf.xlu0
        %v235 = vpop.trf.xlu0
        %v236 = vpop.trf.xlu0
        %v237 = vpop.trf.xlu0
        %v238 = vpop.trf.xlu0
        %v239 = vpop.trf.xlu0
        %v240 = vpop.trf.xlu0
        %v241 = vpop.trf.xlu0
        %v242 = vxor.u32 %v194, 2147483648
        %v243 = vxor.u32 %v226, 2147483648
        %v244 = vmul.f32 %v242, 1.442695
        %v245 = vpow.pop %v244
        %v246 = vmul.f32 %v243, 1.442695
        %v247 = vpow.pop %v246
        %v248 = vadd.f32 %v245, 1.0
        %v249 = vadd.f32 %v247, 1.0
        %v250 = vrcp.pop %v248
        %v251 = vmul.f32 %v248, %v250
        %v252 = vsub.f32 1.0, %v251
        %v253 = vmul.f32 %v250, %v252
        %v254 = vadd.f32 %v250, %v253
        %vm255 = vweird.f32 %v248
        %vm256 = vweird.f32 %v250
        %vm257 = vmor %vm255, %vm256
        %v258 = vsel %vm257, %v250, %v254
        %v259 = vand.u32 2147483647, %v248
        %vm260 = vcmp.eq.f32.partialorder %v259, 8.507059e+37
        %v261 = vand.u32 %v248, 2147483648
        %v262 = vor.u32 1.1754944e-38, %v261
        %v263 = vsel %vm260, %v262, %v258
        %v264 = vmul.f32 1.0, %v263
        %v265 = vrcp.pop %v249
        %v266 = vmul.f32 %v249, %v265
        %v267 = vsub.f32 1.0, %v266
        %v268 = vmul.f32 %v265, %v267
        %v269 = vadd.f32 %v265, %v268
        %vm270 = vweird.f32 %v249
        %vm271 = vweird.f32 %v265
        %vm272 = vmor %vm270, %vm271
        %v273 = vsel %vm272, %v265, %v269
        %v274 = vand.u32 2147483647, %v249
        %vm275 = vcmp.eq.f32.partialorder %v274, 8.507059e+37
        %v276 = vand.u32 %v249, 2147483648
        %v277 = vor.u32 1.1754944e-38, %v276
        %v278 = vsel %vm275, %v277, %v273
        %v279 = vmul.f32 1.0, %v278
        %v281 = vrot.slane %v264, 1
        %v282 = vrot.slane %v264, 2
        %v283 = vrot.slane %v264, 3
        %vm287 = vcmask 122880
        %288 = vst.msk [vmem:[%s134] sm:$0x1] %vm287, %v264
        %289 = vst.msk [vmem:[%s134 + $0x10] sm:$0x1] %vm287, %v281
        %290 = vst.msk [vmem:[%s134 + $0x20] sm:$0x1] %vm287, %v282
        %291 = vst.msk [vmem:[%s134 + $0x30] sm:$0x1] %vm287, %v283
        %v292 = vperm.slane %v264, 0
        %v293 = vperm.slane %v281, 0
        %v294 = vperm.slane %v282, 0
        %v295 = vperm.slane %v283, 0
        %296 = vrot.lane.b32.xlu0 %v292, 112
        %v297 = vpop.permute.xlu0 %296
        %298 = vrot.lane.b32.xlu0 %v293, 112
        %v299 = vpop.permute.xlu0 %298
        %300 = vrot.lane.b32.xlu0 %v294, 112
        %v301 = vpop.permute.xlu0 %300
        %302 = vrot.lane.b32.xlu0 %v295, 112
        %v303 = vpop.permute.xlu0 %302
        %308 = vst.msk [vmem:[%s134 + $0x1] sm:$0x1] %vm287, %v297
        %309 = vst.msk [vmem:[%s134 + $0x11] sm:$0x1] %vm287, %v299
        %310 = vst.msk [vmem:[%s134 + $0x21] sm:$0x1] %vm287, %v301
        %311 = vst.msk [vmem:[%s134 + $0x31] sm:$0x1] %vm287, %v303
        %312 = vrot.lane.b32.xlu0 %v292, 96
        %v313 = vpop.permute.xlu0 %312
        %314 = vrot.lane.b32.xlu0 %v293, 96
        %v315 = vpop.permute.xlu0 %314
        %316 = vrot.lane.b32.xlu0 %v294, 96
        %v317 = vpop.permute.xlu0 %316
        %318 = vrot.lane.b32.xlu0 %v295, 96
        %v319 = vpop.permute.xlu0 %318
        %324 = vst.msk [vmem:[%s134 + $0x2] sm:$0x1] %vm287, %v313
        %325 = vst.msk [vmem:[%s134 + $0x12] sm:$0x1] %vm287, %v315
        %326 = vst.msk [vmem:[%s134 + $0x22] sm:$0x1] %vm287, %v317
        %327 = vst.msk [vmem:[%s134 + $0x32] sm:$0x1] %vm287, %v319
        %328 = vrot.lane.b32.xlu0 %v292, 80
        %v329 = vpop.permute.xlu0 %328
        %330 = vrot.lane.b32.xlu0 %v293, 80
        %v331 = vpop.permute.xlu0 %330
        %332 = vrot.lane.b32.xlu0 %v294, 80
        %v333 = vpop.permute.xlu0 %332
        %334 = vrot.lane.b32.xlu0 %v295, 80
        %v335 = vpop.permute.xlu0 %334
        %340 = vst.msk [vmem:[%s134 + $0x3] sm:$0x1] %vm287, %v329
        %341 = vst.msk [vmem:[%s134 + $0x13] sm:$0x1] %vm287, %v331
        %342 = vst.msk [vmem:[%s134 + $0x23] sm:$0x1] %vm287, %v333
        %343 = vst.msk [vmem:[%s134 + $0x33] sm:$0x1] %vm287, %v335
        %344 = vrot.lane.b32.xlu0 %v292, 64
        %v345 = vpop.permute.xlu0 %344
        %346 = vrot.lane.b32.xlu0 %v293, 64
        %v347 = vpop.permute.xlu0 %346
        %348 = vrot.lane.b32.xlu0 %v294, 64
        %v349 = vpop.permute.xlu0 %348
        %350 = vrot.lane.b32.xlu0 %v295, 64
        %v351 = vpop.permute.xlu0 %350
        %356 = vst.msk [vmem:[%s134 + $0x4] sm:$0x1] %vm287, %v345
        %357 = vst.msk [vmem:[%s134 + $0x14] sm:$0x1] %vm287, %v347
        %358 = vst.msk [vmem:[%s134 + $0x24] sm:$0x1] %vm287, %v349
        %359 = vst.msk [vmem:[%s134 + $0x34] sm:$0x1] %vm287, %v351
        %360 = vrot.lane.b32.xlu0 %v292, 48
        %v361 = vpop.permute.xlu0 %360
        %362 = vrot.lane.b32.xlu0 %v293, 48
        %v363 = vpop.permute.xlu0 %362
        %364 = vrot.lane.b32.xlu0 %v294, 48
        %v365 = vpop.permute.xlu0 %364
        %366 = vrot.lane.b32.xlu0 %v295, 48
        %v367 = vpop.permute.xlu0 %366
        %372 = vst.msk [vmem:[%s134 + $0x5] sm:$0x1] %vm287, %v361
        %373 = vst.msk [vmem:[%s134 + $0x15] sm:$0x1] %vm287, %v363
        %374 = vst.msk [vmem:[%s134 + $0x25] sm:$0x1] %vm287, %v365
        %375 = vst.msk [vmem:[%s134 + $0x35] sm:$0x1] %vm287, %v367
        %376 = vrot.lane.b32.xlu0 %v292, 32
        %v377 = vpop.permute.xlu0 %376
        %378 = vrot.lane.b32.xlu0 %v293, 32
        %v379 = vpop.permute.xlu0 %378
        %380 = vrot.lane.b32.xlu0 %v294, 32
        %v381 = vpop.permute.xlu0 %380
        %382 = vrot.lane.b32.xlu0 %v295, 32
        %v383 = vpop.permute.xlu0 %382
        %388 = vst.msk [vmem:[%s134 + $0x6] sm:$0x1] %vm287, %v377
        %389 = vst.msk [vmem:[%s134 + $0x16] sm:$0x1] %vm287, %v379
        %390 = vst.msk [vmem:[%s134 + $0x26] sm:$0x1] %vm287, %v381
        %391 = vst.msk [vmem:[%s134 + $0x36] sm:$0x1] %vm287, %v383
        %392 = vrot.lane.b32.xlu0 %v292, 16
        %v393 = vpop.permute.xlu0 %392
        %394 = vrot.lane.b32.xlu0 %v293, 16
        %v395 = vpop.permute.xlu0 %394
        %396 = vrot.lane.b32.xlu0 %v294, 16
        %v397 = vpop.permute.xlu0 %396
        %398 = vrot.lane.b32.xlu0 %v295, 16
        %v399 = vpop.permute.xlu0 %398
        %404 = vst.msk [vmem:[%s134 + $0x7] sm:$0x1] %vm287, %v393
        %405 = vst.msk [vmem:[%s134 + $0x17] sm:$0x1] %vm287, %v395
        %406 = vst.msk [vmem:[%s134 + $0x27] sm:$0x1] %vm287, %v397
        %407 = vst.msk [vmem:[%s134 + $0x37] sm:$0x1] %vm287, %v399
        %v409 = vrot.slane %v279, 1
        %v410 = vrot.slane %v279, 2
        %v411 = vrot.slane %v279, 3
        %415 = vst.msk [vmem:[%s134 + $0x8] sm:$0x1] %vm287, %v279
        %416 = vst.msk [vmem:[%s134 + $0x18] sm:$0x1] %vm287, %v409
        %417 = vst.msk [vmem:[%s134 + $0x28] sm:$0x1] %vm287, %v410
        %418 = vst.msk [vmem:[%s134 + $0x38] sm:$0x1] %vm287, %v411
        %v419 = vperm.slane %v279, 0
        %v420 = vperm.slane %v409, 0
        %v421 = vperm.slane %v410, 0
        %v422 = vperm.slane %v411, 0
        %423 = vrot.lane.b32.xlu0 %v419, 112
        %v424 = vpop.permute.xlu0 %423
        %425 = vrot.lane.b32.xlu0 %v420, 112
        %v426 = vpop.permute.xlu0 %425
        %427 = vrot.lane.b32.xlu0 %v421, 112
        %v428 = vpop.permute.xlu0 %427
        %429 = vrot.lane.b32.xlu0 %v422, 112
        %v430 = vpop.permute.xlu0 %429
        %435 = vst.msk [vmem:[%s134 + $0x9] sm:$0x1] %vm287, %v424
        %436 = vst.msk [vmem:[%s134 + $0x19] sm:$0x1] %vm287, %v426
        %437 = vst.msk [vmem:[%s134 + $0x29] sm:$0x1] %vm287, %v428
        %438 = vst.msk [vmem:[%s134 + $0x39] sm:$0x1] %vm287, %v430
        %439 = vrot.lane.b32.xlu0 %v419, 96
        %v440 = vpop.permute.xlu0 %439
        %441 = vrot.lane.b32.xlu0 %v420, 96
        %v442 = vpop.permute.xlu0 %441
        %443 = vrot.lane.b32.xlu0 %v421, 96
        %v444 = vpop.permute.xlu0 %443
        %445 = vrot.lane.b32.xlu0 %v422, 96
        %v446 = vpop.permute.xlu0 %445
        %451 = vst.msk [vmem:[%s134 + $0xa] sm:$0x1] %vm287, %v440
        %452 = vst.msk [vmem:[%s134 + $0x1a] sm:$0x1] %vm287, %v442
        %453 = vst.msk [vmem:[%s134 + $0x2a] sm:$0x1] %vm287, %v444
        %454 = vst.msk [vmem:[%s134 + $0x3a] sm:$0x1] %vm287, %v446
        %455 = vrot.lane.b32.xlu0 %v419, 80
        %v456 = vpop.permute.xlu0 %455
        %457 = vrot.lane.b32.xlu0 %v420, 80
        %v458 = vpop.permute.xlu0 %457
        %459 = vrot.lane.b32.xlu0 %v421, 80
        %v460 = vpop.permute.xlu0 %459
        %461 = vrot.lane.b32.xlu0 %v422, 80
        %v462 = vpop.permute.xlu0 %461
        %467 = vst.msk [vmem:[%s134 + $0xb] sm:$0x1] %vm287, %v456
        %468 = vst.msk [vmem:[%s134 + $0x1b] sm:$0x1] %vm287, %v458
        %469 = vst.msk [vmem:[%s134 + $0x2b] sm:$0x1] %vm287, %v460
        %470 = vst.msk [vmem:[%s134 + $0x3b] sm:$0x1] %vm287, %v462
        %471 = vrot.lane.b32.xlu0 %v419, 64
        %v472 = vpop.permute.xlu0 %471
        %473 = vrot.lane.b32.xlu0 %v420, 64
        %v474 = vpop.permute.xlu0 %473
        %475 = vrot.lane.b32.xlu0 %v421, 64
        %v476 = vpop.permute.xlu0 %475
        %477 = vrot.lane.b32.xlu0 %v422, 64
        %v478 = vpop.permute.xlu0 %477
        %483 = vst.msk [vmem:[%s134 + $0xc] sm:$0x1] %vm287, %v472
        %484 = vst.msk [vmem:[%s134 + $0x1c] sm:$0x1] %vm287, %v474
        %485 = vst.msk [vmem:[%s134 + $0x2c] sm:$0x1] %vm287, %v476
        %486 = vst.msk [vmem:[%s134 + $0x3c] sm:$0x1] %vm287, %v478
        %487 = vrot.lane.b32.xlu0 %v419, 48
        %v488 = vpop.permute.xlu0 %487
        %489 = vrot.lane.b32.xlu0 %v420, 48
        %v490 = vpop.permute.xlu0 %489
        %491 = vrot.lane.b32.xlu0 %v421, 48
        %v492 = vpop.permute.xlu0 %491
        %493 = vrot.lane.b32.xlu0 %v422, 48
        %v494 = vpop.permute.xlu0 %493
        %499 = vst.msk [vmem:[%s134 + $0xd] sm:$0x1] %vm287, %v488
        %500 = vst.msk [vmem:[%s134 + $0x1d] sm:$0x1] %vm287, %v490
        %501 = vst.msk [vmem:[%s134 + $0x2d] sm:$0x1] %vm287, %v492
        %502 = vst.msk [vmem:[%s134 + $0x3d] sm:$0x1] %vm287, %v494
        %503 = vrot.lane.b32.xlu0 %v419, 32
        %v504 = vpop.permute.xlu0 %503
        %505 = vrot.lane.b32.xlu0 %v420, 32
        %v506 = vpop.permute.xlu0 %505
        %507 = vrot.lane.b32.xlu0 %v421, 32
        %v508 = vpop.permute.xlu0 %507
        %509 = vrot.lane.b32.xlu0 %v422, 32
        %v510 = vpop.permute.xlu0 %509
        %515 = vst.msk [vmem:[%s134 + $0xe] sm:$0x1] %vm287, %v504
        %516 = vst.msk [vmem:[%s134 + $0x1e] sm:$0x1] %vm287, %v506
        %517 = vst.msk [vmem:[%s134 + $0x2e] sm:$0x1] %vm287, %v508
        %518 = vst.msk [vmem:[%s134 + $0x3e] sm:$0x1] %vm287, %v510
        %519 = vrot.lane.b32.xlu0 %v419, 16
        %v520 = vpop.permute.xlu0 %519
        %521 = vrot.lane.b32.xlu0 %v420, 16
        %v522 = vpop.permute.xlu0 %521
        %523 = vrot.lane.b32.xlu0 %v421, 16
        %v524 = vpop.permute.xlu0 %523
        %525 = vrot.lane.b32.xlu0 %v422, 16
        %v526 = vpop.permute.xlu0 %525
        %531 = vst.msk [vmem:[%s134 + $0xf] sm:$0x1] %vm287, %v520
        %532 = vst.msk [vmem:[%s134 + $0x1f] sm:$0x1] %vm287, %v522
        %533 = vst.msk [vmem:[%s134 + $0x2f] sm:$0x1] %vm287, %v524
        %534 = vst.msk [vmem:[%s134 + $0x3f] sm:$0x1] %vm287, %v526
        %s535 = sand.u32 %s65, 1
        %s536 = scalar_lea.sflag [#allocation3], %s535
        %s537 = sand.u32 %s65, 1
        %s538 = smul.addr %s537, 64
        %s539 = scalar_lea.vmem [#allocation2], %s538
        // Predicated region
        $region25: #{tpu_custom_call.1} parent=23 // pred_check
          %p540 = pneg %p75
        $region26: #{tpu_custom_call.1} parent=23 // pred_check_branch
          %542 = sbr.rel (%p540) target = $region28
        $region27: #{tpu_custom_call.1} parent=23 // pred_region
          %s543 = smul.u32 2, %s20
          %545 = vsyncadd %s536, 0
          %s546 = smul.addr %s19, 8
          %s547 = sadd.s32 %s543, %s546
          %s548 = smul.addr %s547, 8
          %s549 = scalar_lea.hbm %s1, %s548
          %s550 = sshll.u32 %s539, 4
          %s551 = int_to_ptr.vmem [resolvable:$true] %s550
          %s552 = sshll.u32 %s549, 4
          %s553 = int_to_ptr.hbm [resolvable:$true] %s552
          %558 = dma.vmem_to_hbm [thread:$0]  %s551, 1024, %s553, %s536, 128, 128, 8
        $region28: #{tpu_custom_call.1} parent=23 // pred_fallthru
          _
      $region24: #{tpu_custom_call.1} parent=5 // pred_fallthru
        _
      %p559 = scmp.le.s32.totalorder 2, %s10
      // Predicated region
      $region29: #{tpu_custom_call.1} parent=5 // pred_check
        %p560 = pneg %p559
      $region30: #{tpu_custom_call.1} parent=5 // pred_check_branch
        %562 = sbr.rel (%p560) target = $region32
      $region31: #{tpu_custom_call.1} parent=5 // pred_region
        %s563 = ssub.s32 %s10, 2
        // Predicated region
        $region33: #{tpu_custom_call.1} parent=31 // pred_check
          %p564 = pneg %p81
        $region34: #{tpu_custom_call.1} parent=31 // pred_check_branch
          %566 = sbr.rel (%p564) target = $region36
        $region35: #{tpu_custom_call.1} parent=31 // pred_region
          %s567 = sand.u32 %s66, 1
          %s568 = scalar_lea.sflag [#allocation3], %s567
          %s569 = sand.u32 %s66, 1
          %s570 = smul.addr %s569, 64
          %s571 = scalar_lea.vmem [#allocation2], %s570
          %573 = dma.done %s568, 1024
        $region36: #{tpu_custom_call.1} parent=31 // pred_fallthru
          _
      $region32: #{tpu_custom_call.1} parent=5 // pred_fallthru
        _
    $region6: #{tpu_custom_call.1} parent=1 // loop_footer
      %s14 = sadd.s32 1, %s10
    $region7: #{tpu_custom_call.1} parent=1 // loop_footer_branch
      %9 = sbr.rel target = $region3
    $region8: #{tpu_custom_call.1} parent=1 // loop_exit
      _
    %574 = vsyncpa [#allocation3], 1
    %s575 = scalar_lea.sflag [#allocation3], 1
    %576 = vsyncpa %s575, 1

</llo_original>
